<compile_context>
chip_gen: v5e
topology: v5e:2x2
jax: 0.10.0
libtpu: 0.0.40
codegen_flags: <defaults>
</compile_context>

<pallas_src>
import functools

import jax
import jax.numpy as jnp
import numpy as np
from jax.experimental import pallas as pl
from jax.experimental.pallas import tpu as pltpu

Z_RATIO = 0.8
GN_EPS = 1e-5


def _round_up(n, m):
    return ((n + m - 1) // m) * m


def _padded_bytes(shape, dtype):
    """Rough VMEM-resident bytes for one array (lane/sublane tile padding)."""
    it = np.dtype(dtype).itemsize
    shape = tuple(shape)
    if len(shape) == 1:
        shape = (1,) + shape
    lead = 1
    for d in shape[:-2]:
        lead *= int(d)
    sub = 8 * max(1, 4 // it)                 # (8,128) f32 tile, (16,128) bf16 tile
    rp = _round_up(int(shape[-2]), sub)
    cp = _round_up(int(shape[-1]), 128)
    return lead * rp * cp * it


# --------------------------------------------------------------------------- #
# Kernel bodies
# --------------------------------------------------------------------------- #
def _transform_aggregate_norm(x, adj_ref, a_ref, wt_ref, bt_ref,
                              gnw_ref, gnb_ref, gnms_ref, n_nodes, ew_dtype):
    """Shared front half: per-label transform, mix, mean aggregation, GraphNorm."""
    c = gnw_ref.shape[-1]                      # C_out (static)
    nr = x.shape[0]                            # padded node count (multiple of 8)

    # fused per-label transform: one MXU pass over packed [Wt0 | Wt1]
    t = jnp.dot(x, wt_ref[...], preferred_element_type=jnp.float32) + bt_ref[...]
    t = jnp.maximum(t.astype(ew_dtype), 0)     # ReLU (bf16 on v6e/v7x, f32 on v5e)
    x0 = t[:, :c]
    x1 = t[:, c:]
    a = a_ref[...].astype(ew_dtype)            # single (Nr,1)->(Nr,C) broadcast
    xm = (x0 + a * (x1 - x0)).astype(jnp.bfloat16)   # == where(mask, z*x1+(1-z)*x0, ...)

    # mean aggregation; the augmented adjacency carries (1/N)*1^T*(D^-1 A) as an
    # extra row block so E[h] drops out of the same MXU pass (no extra reduction).
    h_aug = jnp.dot(adj_ref[...], xm, preferred_element_type=jnp.float32)  # (Nr+8, C)
    h = h_aug[:nr, :]
    mean = h_aug[nr:nr + 1, :]                 # fused E[h] row (sublane-aligned)

    # GraphNorm (weight, bias, mean_scale; eps=1e-5), f32 statistics
    meansq = jnp.sum(h * h, axis=0, keepdims=True) * (1.0 / n_nodes)
    shift = mean * gnms_ref[...]
    var = jnp.maximum(meansq - shift * (2.0 * mean - shift), 0.0)
    hn = gnw_ref[...] * (h - shift) * jax.lax.rsqrt(var + GN_EPS) + gnb_ref[...]
    # dropout: identity (module evaluated with training=False)
    return hn


def glass_conv_kernel_split(x_ref, adj_ref, a_ref, wt_ref, bt_ref,
                            gnw_ref, gnb_ref, gnms_ref,
                            wch_ref, wcx_ref, bc_ref,
                            y_ref, *, n_nodes, ew_dtype):
    """Concat removed via split weights: [hn | x] @ Wc == hn @ Wc_hn + x @ Wc_x."""
    x = x_ref[...]                             # (Nr, Cin) bf16
    hn = _transform_aggregate_norm(x, adj_ref, a_ref, wt_ref, bt_ref,
                                   gnw_ref, gnb_ref, gnms_ref, n_nodes, ew_dtype)
    y_ref[...] = (jnp.dot(hn.astype(jnp.bfloat16), wch_ref[...],
                          preferred_element_type=jnp.float32)
                  + jnp.dot(x, wcx_ref[...], preferred_element_type=jnp.float32)
                  + bc_ref[...])               # packed (Nr, 2*C_out) f32


def glass_conv_kernel_merged(x_ref, adj_ref, a_ref, wt_ref, bt_ref,
                             gnw_ref, gnb_ref, gnms_ref,
                             wc_ref, bc_ref,
                             y_ref, cat_ref, *, n_nodes, ew_dtype):
    """Single wide-K combination matmul via a VMEM concat slab (C_out % 128 == 0)."""
    c = gnw_ref.shape[-1]
    x = x_ref[...]
    hn = _transform_aggregate_norm(x, adj_ref, a_ref, wt_ref, bt_ref,
                                   gnw_ref, gnb_ref, gnms_ref, n_nodes, ew_dtype)
    cat_ref[:, :c] = hn.astype(jnp.bfloat16)   # lane-aligned stores (c % 128 == 0)
    cat_ref[:, c:] = x
    y_ref[...] = (jnp.dot(cat_ref[...], wc_ref[...],
                          preferred_element_type=jnp.float32)
                  + bc_ref[...])


# --------------------------------------------------------------------------- #
# Glue: layer-invariant graph constants and parameter packing
# --------------------------------------------------------------------------- #
def precompute_graph(adj_dense, mask, z_ratio=Z_RATIO):
    """Hoisted graph quantities: D^-1 A (augmented with the mean row), mix coeff."""
    n = adj_dense.shape[0]
    n_r = _round_up(n, 8)
    adj = jnp.pad(adj_dense, ((0, n_r - n), (0, n_r - n)))
    deg = jnp.sum(adj, axis=1, keepdims=True)
    deg = jnp.where(deg < 0.5, deg + 1.0, deg)            # isolated-node handling
    adj_norm = adj / deg                                  # D^-1 A, f32
    mean_row = jnp.sum(adj_norm, axis=0, keepdims=True) / n   # (1/N) * 1^T (D^-1 A)
    adj_aug = jnp.concatenate(
        [adj_norm, mean_row, jnp.zeros((7, n_r), adj_norm.dtype)], axis=0
    ).astype(jnp.bfloat16)                                # (n_r + 8, n_r)

    a = jnp.where(mask > 0.5, z_ratio, 1.0 - z_ratio).astype(jnp.float32)  # (n, 1)
    a_pad = jnp.pad(a, ((0, n_r - n), (0, 0)))
    return {"adj_aug": adj_aug, "a": a, "a_pad": a_pad, "n": n, "n_r": n_r}


def pack_params(params):
    """Fuse per-label weight pairs; keep both split and full combination weights."""
    c_out = params["gn_w"].shape[-1]
    wt = jnp.concatenate([params["wt0"], params["wt1"]], axis=1)   # (Cin, 2C)
    bt = jnp.concatenate([params["bt0"], params["bt1"]], axis=1)   # (1, 2C)
    wc = jnp.concatenate([params["wc0"], params["wc1"]], axis=1)   # (C+Cin, 2C)
    bc = jnp.concatenate([params["bc0"], params["bc1"]], axis=1)   # (1, 2C)
    return {
        "wt": wt.astype(jnp.bfloat16),
        "bt": bt,
        "wc": wc.astype(jnp.bfloat16),            # full, for the merged (wide-K) path
        "wch": wc[:c_out].astype(jnp.bfloat16),   # multiplies GraphNorm output
        "wcx": wc[c_out:].astype(jnp.bfloat16),   # multiplies original x
        "bc": bc,
        "gn_w": params["gn_w"], "gn_b": params["gn_b"], "gn_ms": params["gn_ms"],
    }


# --------------------------------------------------------------------------- #
# Wrapper
# --------------------------------------------------------------------------- #
def glass_conv(x, graph, packed, *, elementwise_bf16=None):
    """Single-block kernel (everything fits VMEM at these sizes; no grid)."""
    n, n_r = graph["n"], graph["n_r"]
    c_in = x.shape[-1]
    c_out = packed["gn_w"].shape[-1]

    if elementwise_bf16 is None:
        kind = jax.devices()[0].device_kind.lower()
        # bf16 VALU exists on v6e/v7x; v5e (and unknown) keep the f32 elementwise path.
        elementwise_bf16 = ("v6" in kind) or ("v7" in kind)
    ew_dtype = jnp.bfloat16 if elementwise_bf16 else jnp.float32

    x_bf = jnp.pad(x, ((0, n_r - n), (0, 0))).astype(jnp.bfloat16)

    merged = (c_out % 128 == 0)                 # lane-aligned concat stores only
    vmem = pl.BlockSpec(memory_space=pltpu.MemorySpace.VMEM)
    common = (x_bf, graph["adj_aug"], graph["a_pad"],
              packed["wt"], packed["bt"],
              packed["gn_w"], packed["gn_b"], packed["gn_ms"])
    if merged:
        args = common + (packed["wc"], packed["bc"])
        kernel = functools.partial(glass_conv_kernel_merged,
                                   n_nodes=n, ew_dtype=ew_dtype)
        scratch = [pltpu.VMEM((n_r, c_out + c_in), jnp.bfloat16)]
    else:
        args = common + (packed["wch"], packed["wcx"], packed["bc"])
        kernel = functools.partial(glass_conv_kernel_split,
                                   n_nodes=n, ew_dtype=ew_dtype)
        scratch = []

    # advisory cost + VMEM limit sized to the resident footprint (adj dominates)
    flops = (2 * n_r * c_in * 2 * c_out              # per-label transform
             + 2 * (n_r + 8) * n_r * c_out           # mean aggregation (+ fused mean)
             + 2 * n_r * (c_in + c_out) * 2 * c_out) # combination linears
    out_bytes = n_r * 2 * c_out * 4
    bytes_accessed = int(sum(int(a_.size) * a_.dtype.itemsize for a_ in args)
                         + out_bytes)
    est = sum(_padded_bytes(a_.shape, a_.dtype) for a_ in args)
    est += _padded_bytes((n_r, 2 * c_out), jnp.float32)            # output
    est += 3 * _padded_bytes((n_r + 8, 2 * c_out), jnp.float32)    # t / h_aug / hn
    if merged:
        est += _padded_bytes((n_r, c_out + c_in), jnp.bfloat16)
    vmem_limit = int(min(48 * 2**20, max(32 * 2**20, 4 * est)))

    y = pl.pallas_call(
        kernel,
        out_shape=jax.ShapeDtypeStruct((n_r, 2 * c_out), jnp.float32),
        in_specs=[vmem] * len(args),
        out_specs=vmem,
        scratch_shapes=scratch,
        compiler_params=pltpu.CompilerParams(vmem_limit_bytes=vmem_limit),
        cost_estimate=pl.CostEstimate(flops=flops, transcendentals=c_out,
                                      bytes_accessed=bytes_accessed),
    )(*args)

    # Final per-label mix in XLA keeps the kernel's store slab packed (2*C_out lanes).
    y0 = y[:n, :c_out]
    y1 = y[:n, c_out:]
    return y0 + graph["a"] * (y1 - y0)


# --------------------------------------------------------------------------- #
# Deterministic parameter init (nn.Linear-style) and example run
# --------------------------------------------------------------------------- #
def init_params(key, c_in, c_out):
    ks = jax.random.split(key, 8)

    def lin(kw, kb, fan_in, fan_out):
        bound = 1.0 / jnp.sqrt(fan_in)
        w = jax.random.uniform(kw, (fan_in, fan_out), jnp.float32, -bound, bound)
        b = jax.random.uniform(kb, (1, fan_out), jnp.float32, -bound, bound)
        return w, b

    wt0, bt0 = lin(ks[0], ks[1], c_in, c_out)
    wt1, bt1 = lin(ks[2], ks[3], c_in, c_out)
    wc0, bc0 = lin(ks[4], ks[5], c_in + c_out, c_out)
    wc1, bc1 = lin(ks[6], ks[7], c_in + c_out, c_out)
    return {
        "wt0": wt0, "bt0": bt0, "wt1": wt1, "bt1": bt1,
        "wc0": wc0, "bc0": bc0, "wc1": wc1, "bc1": bc1,
        "gn_w": jnp.ones((1, c_out), jnp.float32),
        "gn_b": jnp.zeros((1, c_out), jnp.float32),
        "gn_ms": jnp.ones((1, c_out), jnp.float32),
    }


if __name__ == "__main__":
    N, C_IN, C_OUT, E = 64, 32, 32, 256

    key = jax.random.PRNGKey(0)
    k_x, k_e1, k_e2, k_m, k_p = jax.random.split(key, 5)

    x = jax.random.normal(k_x, (N, C_IN), jnp.float32)

    # random graph: ring edges (both directions) + E random edges, unit weights
    ring_src = jnp.arange(N, dtype=jnp.int32)
    ring_dst = (ring_src + 1) % N
    rnd_src = jax.random.randint(k_e1, (E,), 0, N, jnp.int32)
    rnd_dst = jax.random.randint(k_e2, (E,), 0, N, jnp.int32)
    src = jnp.concatenate([ring_src, ring_dst, rnd_src])
    dst = jnp.concatenate([ring_dst, ring_src, rnd_dst])
    edge_weight = jnp.ones_like(src, dtype=jnp.float32)

    # glue: densify the sparse COO adjacency (duplicate edges sum, like coalesce);
    # orientation matches buildAdj: adj[src, dst], row-sum degree, adj @ x.
    adj_dense = jnp.zeros((N, N), jnp.float32).at[src, dst].add(edge_weight)

    # mask: node-in-subgraph indicator (z > 0.5 in the reference forward)
    mask = (jax.random.uniform(k_m, (N, 1)) > 0.5).astype(jnp.float32)

    params = init_params(k_p, C_IN, C_OUT)

    # graph-constant + parameter packing, done once (layer-invariant in GLASS)
    graph = precompute_graph(adj_dense, mask)
    packed = pack_params(params)

    out = glass_conv(x, graph, packed)
    jax.block_until_ready(out)
    assert out.shape == (N, C_OUT) and out.dtype == jnp.float32
    print("KERNEL_OK")
</pallas_src>

<mosaic_0001>
module attributes {stable_mosaic.version = 11 : i64} {
  func.func @glass_conv_kernel_split(%arg0: memref<64x32xbf16, #tpu.memory_space<vmem>>, %arg1: memref<72x64xbf16, #tpu.memory_space<vmem>>, %arg2: memref<64x1xf32, #tpu.memory_space<vmem>>, %arg3: memref<32x64xbf16, #tpu.memory_space<vmem>>, %arg4: memref<1x64xf32, #tpu.memory_space<vmem>>, %arg5: memref<1x32xf32, #tpu.memory_space<vmem>>, %arg6: memref<1x32xf32, #tpu.memory_space<vmem>>, %arg7: memref<1x32xf32, #tpu.memory_space<vmem>>, %arg8: memref<32x64xbf16, #tpu.memory_space<vmem>>, %arg9: memref<32x64xbf16, #tpu.memory_space<vmem>>, %arg10: memref<1x64xf32, #tpu.memory_space<vmem>>, %arg11: memref<64x64xf32, #tpu.memory_space<vmem>>) attributes {dimension_semantics = [], scalar_prefetch = 0 : i64, scratch_operands = 0 : i64, tpu.core_type = #tpu.core_type<tc>} {
    %c0 = arith.constant 0 : index
    %c0_0 = arith.constant 0 : index
    %0 = vector.load %arg0[%c0, %c0_0] : memref<64x32xbf16, #tpu.memory_space<vmem>>, vector<64x32xbf16>
    %c0_1 = arith.constant 0 : index
    %c0_2 = arith.constant 0 : index
    %1 = vector.load %arg3[%c0_1, %c0_2] : memref<32x64xbf16, #tpu.memory_space<vmem>>, vector<32x64xbf16>
    %cst = arith.constant dense<0.000000e+00> : vector<64x64xf32>
    %2 = tpu.matmul %0, %1, %cst {dimension_numbers = #tpu.dot_dimension_numbers<[1], [0], [0], [1], [0, 0, 1, 1], [], []>} : vector<64x32xbf16>, vector<32x64xbf16>, vector<64x64xf32> -> vector<64x64xf32>
    %c0_3 = arith.constant 0 : index
    %c0_4 = arith.constant 0 : index
    %3 = vector.load %arg4[%c0_3, %c0_4] : memref<1x64xf32, #tpu.memory_space<vmem>>, vector<1x64xf32>
    %4 = vector.broadcast %3 : vector<1x64xf32> to vector<64x64xf32>
    %5 = arith.addf %2, %4 : vector<64x64xf32>
    %cst_5 = arith.constant 0.000000e+00 : f32
    %6 = vector.broadcast %cst_5 : f32 to vector<64x64xf32>
    %7 = arith.maximumf %5, %6 : vector<64x64xf32>
    %8 = vector.extract_strided_slice %7 {offsets = [0, 0], sizes = [64, 32], strides = [1, 1]} : vector<64x64xf32> to vector<64x32xf32>
    %9 = vector.extract_strided_slice %7 {offsets = [0, 32], sizes = [64, 32], strides = [1, 1]} : vector<64x64xf32> to vector<64x32xf32>
    %c0_6 = arith.constant 0 : index
    %c0_7 = arith.constant 0 : index
    %10 = vector.load %arg2[%c0_6, %c0_7] : memref<64x1xf32, #tpu.memory_space<vmem>>, vector<64x1xf32>
    %11 = arith.subf %9, %8 : vector<64x32xf32>
    %12 = vector.broadcast %10 : vector<64x1xf32> to vector<64x32xf32>
    %13 = arith.mulf %12, %11 : vector<64x32xf32>
    %14 = arith.addf %8, %13 : vector<64x32xf32>
    %15 = arith.truncf %14 : vector<64x32xf32> to vector<64x32xbf16>
    %c0_8 = arith.constant 0 : index
    %c0_9 = arith.constant 0 : index
    %16 = vector.load %arg1[%c0_8, %c0_9] : memref<72x64xbf16, #tpu.memory_space<vmem>>, vector<72x64xbf16>
    %cst_10 = arith.constant dense<0.000000e+00> : vector<72x32xf32>
    %17 = tpu.matmul %16, %15, %cst_10 {dimension_numbers = #tpu.dot_dimension_numbers<[1], [0], [0], [1], [0, 0, 1, 1], [], []>} : vector<72x64xbf16>, vector<64x32xbf16>, vector<72x32xf32> -> vector<72x32xf32>
    %18 = vector.extract_strided_slice %17 {offsets = [0, 0], sizes = [64, 32], strides = [1, 1]} : vector<72x32xf32> to vector<64x32xf32>
    %19 = vector.extract_strided_slice %17 {offsets = [64, 0], sizes = [1, 32], strides = [1, 1]} : vector<72x32xf32> to vector<1x32xf32>
    %20 = arith.mulf %18, %18 : vector<64x32xf32>
    %cst_11 = arith.constant dense<0.000000e+00> : vector<32xf32>
    %21 = vector.multi_reduction <add>, %20, %cst_11 [0] : vector<64x32xf32> to vector<32xf32>
    %22 = vector.shape_cast %21 : vector<32xf32> to vector<1x32xf32>
    %cst_12 = arith.constant 1.562500e-02 : f32
    %23 = vector.broadcast %cst_12 : f32 to vector<1x32xf32>
    %24 = arith.mulf %22, %23 : vector<1x32xf32>
    %c0_13 = arith.constant 0 : index
    %c0_14 = arith.constant 0 : index
    %25 = vector.load %arg7[%c0_13, %c0_14] : memref<1x32xf32, #tpu.memory_space<vmem>>, vector<1x32xf32>
    %26 = arith.mulf %19, %25 : vector<1x32xf32>
    %cst_15 = arith.constant 2.000000e+00 : f32
    %27 = vector.broadcast %cst_15 : f32 to vector<1x32xf32>
    %28 = arith.mulf %27, %19 : vector<1x32xf32>
    %29 = arith.subf %28, %26 : vector<1x32xf32>
    %30 = arith.mulf %26, %29 : vector<1x32xf32>
    %31 = arith.subf %24, %30 : vector<1x32xf32>
    %cst_16 = arith.constant 0.000000e+00 : f32
    %32 = vector.broadcast %cst_16 : f32 to vector<1x32xf32>
    %33 = arith.maximumf %31, %32 : vector<1x32xf32>
    %c0_17 = arith.constant 0 : index
    %c0_18 = arith.constant 0 : index
    %34 = vector.load %arg5[%c0_17, %c0_18] : memref<1x32xf32, #tpu.memory_space<vmem>>, vector<1x32xf32>
    %35 = vector.broadcast %26 : vector<1x32xf32> to vector<64x32xf32>
    %36 = arith.subf %18, %35 : vector<64x32xf32>
    %37 = vector.broadcast %34 : vector<1x32xf32> to vector<64x32xf32>
    %38 = arith.mulf %37, %36 : vector<64x32xf32>
    %cst_19 = arith.constant 9.99999974E-6 : f32
    %39 = vector.broadcast %cst_19 : f32 to vector<1x32xf32>
    %40 = arith.addf %33, %39 : vector<1x32xf32>
    %41 = math.rsqrt %40 : vector<1x32xf32>
    %42 = vector.broadcast %41 : vector<1x32xf32> to vector<64x32xf32>
    %43 = arith.mulf %38, %42 : vector<64x32xf32>
    %c0_20 = arith.constant 0 : index
    %c0_21 = arith.constant 0 : index
    %44 = vector.load %arg6[%c0_20, %c0_21] : memref<1x32xf32, #tpu.memory_space<vmem>>, vector<1x32xf32>
    %45 = vector.broadcast %44 : vector<1x32xf32> to vector<64x32xf32>
    %46 = arith.addf %43, %45 : vector<64x32xf32>
    %47 = arith.truncf %46 : vector<64x32xf32> to vector<64x32xbf16>
    %c0_22 = arith.constant 0 : index
    %c0_23 = arith.constant 0 : index
    %48 = vector.load %arg8[%c0_22, %c0_23] : memref<32x64xbf16, #tpu.memory_space<vmem>>, vector<32x64xbf16>
    %cst_24 = arith.constant dense<0.000000e+00> : vector<64x64xf32>
    %49 = tpu.matmul %47, %48, %cst_24 {dimension_numbers = #tpu.dot_dimension_numbers<[1], [0], [0], [1], [0, 0, 1, 1], [], []>} : vector<64x32xbf16>, vector<32x64xbf16>, vector<64x64xf32> -> vector<64x64xf32>
    %c0_25 = arith.constant 0 : index
    %c0_26 = arith.constant 0 : index
    %50 = vector.load %arg9[%c0_25, %c0_26] : memref<32x64xbf16, #tpu.memory_space<vmem>>, vector<32x64xbf16>
    %cst_27 = arith.constant dense<0.000000e+00> : vector<64x64xf32>
    %51 = tpu.matmul %0, %50, %cst_27 {dimension_numbers = #tpu.dot_dimension_numbers<[1], [0], [0], [1], [0, 0, 1, 1], [], []>} : vector<64x32xbf16>, vector<32x64xbf16>, vector<64x64xf32> -> vector<64x64xf32>
    %52 = arith.addf %49, %51 : vector<64x64xf32>
    %c0_28 = arith.constant 0 : index
    %c0_29 = arith.constant 0 : index
    %53 = vector.load %arg10[%c0_28, %c0_29] : memref<1x64xf32, #tpu.memory_space<vmem>>, vector<1x64xf32>
    %54 = vector.broadcast %53 : vector<1x64xf32> to vector<64x64xf32>
    %55 = arith.addf %52, %54 : vector<64x64xf32>
    %c0_30 = arith.constant 0 : index
    %c0_31 = arith.constant 0 : index
    %56 = vector.load %arg11[%c0_30, %c0_31] : memref<64x64xf32, #tpu.memory_space<vmem>>, vector<64x64xf32>
    tpu.vector_store %arg11[%c0_30, %c0_31], %55 {strides = array<i32>} : memref<64x64xf32, #tpu.memory_space<vmem>>, vector<64x64xf32>,
    return
  }
}

</mosaic_0001>

<llo_original>
// kernel: tpu_custom_call.1
$region0: #{tpu_custom_call.1}
  #allocation0 [shape = 'u32[]', space=smem, size = 0x4, offset = 0x4, fixed_abs, tag = 'smem constant byte address 0x4 - core index']
  #allocation1 [shape = 'u32[72,128]{1,0:T(1,128)}', space=vmem, size = 0x9000, scoped, tag = 'internal scratch']
  %s0 = inlined_call_operand.vmem [shape: bf16[64,32], index: 0, kind: input, shape index: {}]
  %s1 = inlined_call_operand.vmem [shape: bf16[72,64], index: 1, kind: input, shape index: {}]
  %s2 = inlined_call_operand.vmem [shape: f32[64,1], index: 2, kind: input, shape index: {}]
  %s3 = inlined_call_operand.vmem [shape: bf16[32,64], index: 3, kind: input, shape index: {}]
  %s4 = inlined_call_operand.vmem [shape: f32[1,64], index: 4, kind: input, shape index: {}]
  %s5 = inlined_call_operand.vmem [shape: f32[1,32], index: 5, kind: input, shape index: {}]
  %s6 = inlined_call_operand.vmem [shape: f32[1,32], index: 6, kind: input, shape index: {}]
  %s7 = inlined_call_operand.vmem [shape: f32[1,32], index: 7, kind: input, shape index: {}]
  %s8 = inlined_call_operand.vmem [shape: bf16[32,64], index: 8, kind: input, shape index: {}]
  %s9 = inlined_call_operand.vmem [shape: bf16[32,64], index: 9, kind: input, shape index: {}]
  %s10 = inlined_call_operand.vmem [shape: f32[1,64], index: 10, kind: input, shape index: {}]
  %s11 = inlined_call_operand.hbm [shape: f32[64,64], index: 11, kind: output, shape index: {}]
  %s12 = sld [smem:[#allocation0]]
  $region54: #{tpu_custom_call.1} parent=0
    _
  %s14 = ssub.s32 1, %s12
  %s15 = scalar_select 0, %s14, %s12
  $region1: #{tpu_custom_call.1} parent=0
    #allocation2 [shape = 'u8[32768]{0}', space=vmem, size = 0x8000, scoped, tag = 'output window, operand 0, single buffered']
    #allocation3 [shape = 's32[1]{0}', space=sflag, size = 0x4, scoped, tag = 'scoped memory for tpu_custom_call.1']
    %16 = vsyncpa [#allocation3], 0
    // Predicated region
    $region2: #{tpu_custom_call.1} parent=1 // pred_check
      _
    $region3: #{tpu_custom_call.1} parent=1 // pred_check_branch
      %18 = sbr.rel (0) target = $region5
    $region4: #{tpu_custom_call.1} parent=1 // pred_region
      _
    $region5: #{tpu_custom_call.1} parent=1 // pred_fallthru
      _
    // Predicated region
    $region6: #{tpu_custom_call.1} parent=1 // pred_check
      _
    $region7: #{tpu_custom_call.1} parent=1 // pred_check_branch
      %20 = sbr.rel (0) target = $region9
    $region8: #{tpu_custom_call.1} parent=1 // pred_region
      _
    $region9: #{tpu_custom_call.1} parent=1 // pred_fallthru
      _
    // Predicated region
    $region10: #{tpu_custom_call.1} parent=1 // pred_check
      _
    $region11: #{tpu_custom_call.1} parent=1 // pred_check_branch
      %22 = sbr.rel (0) target = $region13
    $region12: #{tpu_custom_call.1} parent=1 // pred_region
      _
    $region13: #{tpu_custom_call.1} parent=1 // pred_fallthru
      _
    // Predicated region
    $region14: #{tpu_custom_call.1} parent=1 // pred_check
      _
    $region15: #{tpu_custom_call.1} parent=1 // pred_check_branch
      %24 = sbr.rel (0) target = $region17
    $region16: #{tpu_custom_call.1} parent=1 // pred_region
      _
    $region17: #{tpu_custom_call.1} parent=1 // pred_fallthru
      _
    // Predicated region
    $region18: #{tpu_custom_call.1} parent=1 // pred_check
      _
    $region19: #{tpu_custom_call.1} parent=1 // pred_check_branch
      %26 = sbr.rel (0) target = $region21
    $region20: #{tpu_custom_call.1} parent=1 // pred_region
      _
    $region21: #{tpu_custom_call.1} parent=1 // pred_fallthru
      _
    // Predicated region
    $region22: #{tpu_custom_call.1} parent=1 // pred_check
      _
    $region23: #{tpu_custom_call.1} parent=1 // pred_check_branch
      %28 = sbr.rel (0) target = $region25
    $region24: #{tpu_custom_call.1} parent=1 // pred_region
      _
    $region25: #{tpu_custom_call.1} parent=1 // pred_fallthru
      _
    // Predicated region
    $region26: #{tpu_custom_call.1} parent=1 // pred_check
      _
    $region27: #{tpu_custom_call.1} parent=1 // pred_check_branch
      %30 = sbr.rel (0) target = $region29
    $region28: #{tpu_custom_call.1} parent=1 // pred_region
      _
    $region29: #{tpu_custom_call.1} parent=1 // pred_fallthru
      _
    // Predicated region
    $region30: #{tpu_custom_call.1} parent=1 // pred_check
      _
    $region31: #{tpu_custom_call.1} parent=1 // pred_check_branch
      %32 = sbr.rel (0) target = $region33
    $region32: #{tpu_custom_call.1} parent=1 // pred_region
      _
    $region33: #{tpu_custom_call.1} parent=1 // pred_fallthru
      _
    // Predicated region
    $region34: #{tpu_custom_call.1} parent=1 // pred_check
      _
    $region35: #{tpu_custom_call.1} parent=1 // pred_check_branch
      %34 = sbr.rel (0) target = $region37
    $region36: #{tpu_custom_call.1} parent=1 // pred_region
      _
    $region37: #{tpu_custom_call.1} parent=1 // pred_fallthru
      _
    // Predicated region
    $region38: #{tpu_custom_call.1} parent=1 // pred_check
      _
    $region39: #{tpu_custom_call.1} parent=1 // pred_check_branch
      %36 = sbr.rel (0) target = $region41
    $region40: #{tpu_custom_call.1} parent=1 // pred_region
      _
    $region41: #{tpu_custom_call.1} parent=1 // pred_fallthru
      _
    // Predicated region
    $region42: #{tpu_custom_call.1} parent=1 // pred_check
      _
    $region43: #{tpu_custom_call.1} parent=1 // pred_check_branch
      %38 = sbr.rel (0) target = $region45
    $region44: #{tpu_custom_call.1} parent=1 // pred_region
      _
    $region45: #{tpu_custom_call.1} parent=1 // pred_fallthru
      _
    %v40 = vld [vmem:[%s0] sm:$0xf]
    %v41 = vld [vmem:[%s0 + $0x4] sm:$0xf]
    %v42 = vld [vmem:[%s0 + $0x8] sm:$0xf]
    %v43 = vld [vmem:[%s0 + $0xc] sm:$0xf]
    %v44 = vld [vmem:[%s0 + $0x10] sm:$0xf]
    %v45 = vld [vmem:[%s0 + $0x14] sm:$0xf]
    %v46 = vld [vmem:[%s0 + $0x18] sm:$0xf]
    %v47 = vld [vmem:[%s0 + $0x1c] sm:$0xf]
    %v48 = vld [vmem:[%s3] sm:$0xf]
    %v49 = vld [vmem:[%s3 + $0x4] sm:$0xf]
    %v50 = vld [vmem:[%s3 + $0x8] sm:$0xf]
    %v51 = vld [vmem:[%s3 + $0xc] sm:$0xf]
    %v52 = vld [vmem:[%s4] sm:$0x1]
    %v54 = vperm.slane %v52, 0
    %v64 = vunpack.c.l.b16 %v40
    %v65 = vunpack.c.l.b16 %v41
    %v66 = vunpack.c.l.b16 %v42
    %v67 = vunpack.c.l.b16 %v43
    %v68 = vunpack.c.l.b16 %v44
    %v69 = vunpack.c.l.b16 %v45
    %v70 = vunpack.c.l.b16 %v46
    %v71 = vunpack.c.l.b16 %v47
    %v72 = vpack.c.b16 %v65, %v64
    %v73 = vpack.c.b16 %v67, %v66
    %v74 = vpack.c.b16 %v69, %v68
    %v75 = vpack.c.b16 %v71, %v70
    %v80 = vunpack.c.l.b16 %v48
    %v81 = vunpack.c.l.b16 %v49
    %v82 = vunpack.c.l.b16 %v50
    %v83 = vunpack.c.l.b16 %v51
    %v84 = vpack.c.b16 %v81, %v80
    %v85 = vpack.c.b16 %v83, %v82
    %vm88 = vcmask 261120
    %v90 = vsel %vm88, %v72, 0
    %v93 = vsel %vm88, %v73, 0
    %v96 = vsel %vm88, %v74, 0
    %v99 = vsel %vm88, %v75, 0
    %101 = vmatpush.bf16.msra.mxu0 0
    %102 = vmatpush.bf16.msra.mxu0 0
    %103 = vmatpush.bf16.msra.mxu0 0
    %104 = vmatpush.bf16.msra.mxu0 0
    %105 = vmatpush.bf16.msra.mxu0 0
    %106 = vmatpush.bf16.msra.mxu0 0
    %107 = vmatpush.bf16.msra.mxu0 %v85
    %108 = vmatpush.bf16.msra.mxu0 %v84
    %109 = vmatmul.bf16.gmra.mxu0 %v90
    %v110 = vpop.f32.mrf.mxu0
    %v111 = vadd.f32 %v54, %v110
    %v112 = vpop.f32.mrf.mxu0
    %v113 = vadd.f32 %v54, %v112
    %114 = vmatmul.bf16.gmra.mxu0 %v93
    %v115 = vpop.f32.mrf.mxu0
    %v116 = vadd.f32 %v54, %v115
    %v117 = vpop.f32.mrf.mxu0
    %v118 = vadd.f32 %v54, %v117
    %119 = vmatmul.bf16.gmra.mxu0 %v96
    %v120 = vpop.f32.mrf.mxu0
    %v121 = vadd.f32 %v54, %v120
    %v122 = vpop.f32.mrf.mxu0
    %v123 = vadd.f32 %v54, %v122
    %124 = vmatmul.bf16.gmra.mxu0 %v99
    %v125 = vpop.f32.mrf.mxu0
    %v126 = vadd.f32 %v54, %v125
    %v127 = vpop.f32.mrf.mxu0
    %v128 = vadd.f32 %v54, %v127
    %129 = vdwg.mxu0
    %v130 = vmax.f32 %v111, 0.0
    %v131 = vmax.f32 %v113, 0.0
    %v132 = vmax.f32 %v116, 0.0
    %v133 = vmax.f32 %v118, 0.0
    %v134 = vmax.f32 %v121, 0.0
    %v135 = vmax.f32 %v123, 0.0
    %v136 = vmax.f32 %v126, 0.0
    %v137 = vmax.f32 %v128, 0.0
    %v138 = vld [vmem:[%s2] sm:$0xff]
    %v139 = vld [vmem:[%s2 + $0x8] sm:$0xff]
    %v140 = vld [vmem:[%s2 + $0x10] sm:$0xff]
    %v141 = vld [vmem:[%s2 + $0x18] sm:$0xff]
    %v142 = vld [vmem:[%s2 + $0x20] sm:$0xff]
    %v143 = vld [vmem:[%s2 + $0x28] sm:$0xff]
    %v144 = vld [vmem:[%s2 + $0x30] sm:$0xff]
    %v145 = vld [vmem:[%s2 + $0x38] sm:$0xff]
    %154 = vrot.lane.b32.xlu0 %v130, 32
    %v155 = vpop.permute.xlu0 %154
    %156 = vrot.lane.b32.xlu0 %v131, 32
    %v157 = vpop.permute.xlu0 %156
    %158 = vrot.lane.b32.xlu0 %v132, 32
    %v159 = vpop.permute.xlu0 %158
    %160 = vrot.lane.b32.xlu0 %v133, 32
    %v161 = vpop.permute.xlu0 %160
    %162 = vrot.lane.b32.xlu0 %v134, 32
    %v163 = vpop.permute.xlu0 %162
    %164 = vrot.lane.b32.xlu0 %v135, 32
    %v165 = vpop.permute.xlu0 %164
    %166 = vrot.lane.b32.xlu0 %v136, 32
    %v167 = vpop.permute.xlu0 %166
    %168 = vrot.lane.b32.xlu0 %v137, 32
    %v169 = vpop.permute.xlu0 %168
    %v178 = vsub.f32 %v130, %v155
    %v179 = vsub.f32 %v131, %v157
    %v180 = vsub.f32 %v132, %v159
    %v181 = vsub.f32 %v133, %v161
    %v182 = vsub.f32 %v134, %v163
    %v183 = vsub.f32 %v135, %v165
    %v184 = vsub.f32 %v136, %v167
    %v185 = vsub.f32 %v137, %v169
    %187 = vset.pattern.permute.xlu0 0
    %188 = vperm.xlu0 %187, %v138
    %v189 = vpop.permute.xlu0 %188
    %192 = vset.pattern.permute.xlu0 0
    %193 = vperm.xlu0 %192, %v139
    %v194 = vpop.permute.xlu0 %193
    %197 = vset.pattern.permute.xlu0 0
    %198 = vperm.xlu0 %197, %v140
    %v199 = vpop.permute.xlu0 %198
    %202 = vset.pattern.permute.xlu0 0
    %203 = vperm.xlu0 %202, %v141
    %v204 = vpop.permute.xlu0 %203
    %207 = vset.pattern.permute.xlu0 0
    %208 = vperm.xlu0 %207, %v142
    %v209 = vpop.permute.xlu0 %208
    %212 = vset.pattern.permute.xlu0 0
    %213 = vperm.xlu0 %212, %v143
    %v214 = vpop.permute.xlu0 %213
    %217 = vset.pattern.permute.xlu0 0
    %218 = vperm.xlu0 %217, %v144
    %v219 = vpop.permute.xlu0 %218
    %222 = vset.pattern.permute.xlu0 0
    %223 = vperm.xlu0 %222, %v145
    %v224 = vpop.permute.xlu0 %223
    %v226 = vmul.f32 %v189, %v178
    %v227 = vmul.f32 %v194, %v179
    %v228 = vmul.f32 %v199, %v180
    %v229 = vmul.f32 %v204, %v181
    %v230 = vmul.f32 %v209, %v182
    %v231 = vmul.f32 %v214, %v183
    %v232 = vmul.f32 %v219, %v184
    %v233 = vmul.f32 %v224, %v185
    %242 = vrot.lane.b32.xlu0 %v226, 96
    %v243 = vpop.permute.xlu0 %242
    %244 = vrot.lane.b32.xlu0 %v227, 96
    %v245 = vpop.permute.xlu0 %244
    %246 = vrot.lane.b32.xlu0 %v228, 96
    %v247 = vpop.permute.xlu0 %246
    %248 = vrot.lane.b32.xlu0 %v229, 96
    %v249 = vpop.permute.xlu0 %248
    %250 = vrot.lane.b32.xlu0 %v230, 96
    %v251 = vpop.permute.xlu0 %250
    %252 = vrot.lane.b32.xlu0 %v231, 96
    %v253 = vpop.permute.xlu0 %252
    %254 = vrot.lane.b32.xlu0 %v232, 96
    %v255 = vpop.permute.xlu0 %254
    %256 = vrot.lane.b32.xlu0 %v233, 96
    %v257 = vpop.permute.xlu0 %256
    %v266 = vadd.f32 %v130, %v243
    %v267 = vadd.f32 %v131, %v245
    %v268 = vadd.f32 %v132, %v247
    %v269 = vadd.f32 %v133, %v249
    %v270 = vadd.f32 %v134, %v251
    %v271 = vadd.f32 %v135, %v253
    %v272 = vadd.f32 %v136, %v255
    %v273 = vadd.f32 %v137, %v257
    %v274 = vpack.c.bf16 %v267, %v266
    %v275 = vpack.c.bf16 %v269, %v268
    %v276 = vpack.c.bf16 %v271, %v270
    %v277 = vpack.c.bf16 %v273, %v272
    %v278 = vld [vmem:[%s1] sm:$0xf]
    %v279 = vld [vmem:[%s1 + $0x4] sm:$0xf]
    %v280 = vld [vmem:[%s1 + $0x8] sm:$0xf]
    %v281 = vld [vmem:[%s1 + $0xc] sm:$0xf]
    %v282 = vld [vmem:[%s1 + $0x10] sm:$0xf]
    %v283 = vld [vmem:[%s1 + $0x14] sm:$0xf]
    %v284 = vld [vmem:[%s1 + $0x18] sm:$0xf]
    %v285 = vld [vmem:[%s1 + $0x1c] sm:$0xf]
    %v286 = vld [vmem:[%s1 + $0x20] sm:$0xf]
    %v296 = vunpack.c.l.b16 %v278
    %v297 = vunpack.c.l.b16 %v279
    %v298 = vunpack.c.l.b16 %v280
    %v299 = vunpack.c.l.b16 %v281
    %v300 = vunpack.c.l.b16 %v282
    %v301 = vunpack.c.l.b16 %v283
    %v302 = vunpack.c.l.b16 %v284
    %v303 = vunpack.c.l.b16 %v285
    %v304 = vunpack.c.l.b16 %v286
    %v305 = vpack.c.b16 %v297, %v296
    %v306 = vpack.c.b16 %v299, %v298
    %v307 = vpack.c.b16 %v301, %v300
    %v308 = vpack.c.b16 %v303, %v302
    %v309 = vpack.c.b16 %v304, %v304
    %vm310 = vcmask 523264
    %v312 = vsel %vm310, %v305, 0
    %v315 = vsel %vm310, %v306, 0
    %v318 = vsel %vm310, %v307, 0
    %v321 = vsel %vm310, %v308, 0
    %v324 = vsel %vm310, %v309, 0
    %326 = vmatpush.bf16.msra.mxu0 0
    %327 = vmatpush.bf16.msra.mxu0 0
    %328 = vmatpush.bf16.msra.mxu0 0
    %329 = vmatpush.bf16.msra.mxu0 0
    %330 = vmatpush.bf16.msra.mxu0 %v277
    %331 = vmatpush.bf16.msra.mxu0 %v276
    %332 = vmatpush.bf16.msra.mxu0 %v275
    %333 = vmatpush.bf16.msra.mxu0 %v274
    %334 = vmatmul.bf16.gmra.mxu0 %v312
    %v335 = vpop.f32.mrf.mxu0
    %v336 = vadd.f32 0.0, %v335
    %v337 = vpop.f32.mrf.mxu0
    %v338 = vadd.f32 0.0, %v337
    %339 = vmatmul.bf16.gmra.mxu0 %v315
    %v340 = vpop.f32.mrf.mxu0
    %v341 = vadd.f32 0.0, %v340
    %v342 = vpop.f32.mrf.mxu0
    %v343 = vadd.f32 0.0, %v342
    %344 = vmatmul.bf16.gmra.mxu0 %v318
    %v345 = vpop.f32.mrf.mxu0
    %v346 = vadd.f32 0.0, %v345
    %v347 = vpop.f32.mrf.mxu0
    %v348 = vadd.f32 0.0, %v347
    %349 = vmatmul.bf16.gmra.mxu0 %v321
    %v350 = vpop.f32.mrf.mxu0
    %v351 = vadd.f32 0.0, %v350
    %v352 = vpop.f32.mrf.mxu0
    %v353 = vadd.f32 0.0, %v352
    %354 = vmatmul.bf16.gmra.mxu0 %v324
    %v355 = vpop.f32.mrf.mxu0
    %v356 = vadd.f32 0.0, %v355
    %v357 = vpop.f32.mrf.mxu0
    %358 = vdwg.mxu0
    %v359 = vmul.f32 %v336, %v336
    %v360 = vmul.f32 %v338, %v338
    %v361 = vmul.f32 %v341, %v341
    %v362 = vmul.f32 %v343, %v343
    %v363 = vmul.f32 %v346, %v346
    %v364 = vmul.f32 %v348, %v348
    %v365 = vmul.f32 %v351, %v351
    %v366 = vmul.f32 %v353, %v353
    %v367 = vsel %vm88, %v359, 0.0
    %v368 = vsel %vm88, %v360, 0.0
    %v369 = vadd.f32 %v367, %v368
    %v370 = vsel %vm88, %v361, 0.0
    %v371 = vadd.f32 %v369, %v370
    %v372 = vsel %vm88, %v362, 0.0
    %v373 = vadd.f32 %v371, %v372
    %v374 = vsel %vm88, %v363, 0.0
    %v375 = vadd.f32 %v373, %v374
    %v376 = vsel %vm88, %v364, 0.0
    %v377 = vadd.f32 %v375, %v376
    %v378 = vsel %vm88, %v365, 0.0
    %v379 = vadd.f32 %v377, %v378
    %v380 = vsel %vm88, %v366, 0.0
    %v381 = vadd.f32 %v379, %v380
    %v382 = vrot.slane %v381, 4
    %v383 = vadd.f32 %v381, %v382
    %v384 = vrot.slane %v383, 2
    %v385 = vadd.f32 %v383, %v384
    %v386 = vrot.slane %v385, 1
    %v387 = vadd.f32 %v385, %v386
    %v388 = vmul.f32 %v387, 0.015625
    %v389 = vld [vmem:[%s7] sm:$0x1]
    %v390 = vmul.f32 %v356, %v389
    %v391 = vmul.f32 %v356, 2.0
    %v392 = vsub.f32 %v391, %v390
    %v393 = vmul.f32 %v390, %v392
    %v394 = vsub.f32 %v388, %v393
    %v395 = vmax.f32 %v394, 0.0
    %v396 = vld [vmem:[%s5] sm:$0x1]
    %v397 = vperm.slane %v390, 0
    %v398 = vsub.f32 %v336, %v397
    %v399 = vsub.f32 %v338, %v397
    %v400 = vsub.f32 %v341, %v397
    %v401 = vsub.f32 %v343, %v397
    %v402 = vsub.f32 %v346, %v397
    %v403 = vsub.f32 %v348, %v397
    %v404 = vsub.f32 %v351, %v397
    %v405 = vsub.f32 %v353, %v397
    %v407 = vperm.slane %v396, 0
    %v409 = vmul.f32 %v407, %v398
    %v410 = vmul.f32 %v407, %v399
    %v411 = vmul.f32 %v407, %v400
    %v412 = vmul.f32 %v407, %v401
    %v413 = vmul.f32 %v407, %v402
    %v414 = vmul.f32 %v407, %v403
    %v415 = vmul.f32 %v407, %v404
    %v416 = vmul.f32 %v407, %v405
    %v417 = vadd.f32 %v395, 1e-05
    %v418 = vrsqrt.pop %v417
    %v419 = vmul.f32 %v418, %v417
    %v420 = vmul.f32 %v419, %v418
    %v421 = vmul.f32 0.5, %v420
    %v422 = vsub.f32 1.5, %v421
    %v423 = vmul.f32 %v418, %v422
    %vm424 = vweird.f32 %v417
    %vm425 = vweird.f32 %v418
    %vm426 = vmor %vm424, %vm425
    %v427 = vsel %vm426, %v418, %v423
    %v428 = vperm.slane %v427, 0
    %v429 = vmul.f32 %v409, %v428
    %v430 = vmul.f32 %v410, %v428
    %v431 = vmul.f32 %v411, %v428
    %v432 = vmul.f32 %v412, %v428
    %v433 = vmul.f32 %v413, %v428
    %v434 = vmul.f32 %v414, %v428
    %v435 = vmul.f32 %v415, %v428
    %v436 = vmul.f32 %v416, %v428
    %v437 = vld [vmem:[%s6] sm:$0x1]
    %v439 = vperm.slane %v437, 0
    %v441 = vadd.f32 %v429, %v439
    %v442 = vadd.f32 %v430, %v439
    %v443 = vadd.f32 %v431, %v439
    %v444 = vadd.f32 %v432, %v439
    %v445 = vadd.f32 %v433, %v439
    %v446 = vadd.f32 %v434, %v439
    %v447 = vadd.f32 %v435, %v439
    %v448 = vadd.f32 %v436, %v439
    %v449 = vpack.c.bf16 %v442, %v441
    %v450 = vpack.c.bf16 %v444, %v443
    %v451 = vpack.c.bf16 %v446, %v445
    %v452 = vpack.c.bf16 %v448, %v447
    %v453 = vld [vmem:[%s8] sm:$0xf]
    %v454 = vld [vmem:[%s8 + $0x4] sm:$0xf]
    %v455 = vld [vmem:[%s8 + $0x8] sm:$0xf]
    %v456 = vld [vmem:[%s8 + $0xc] sm:$0xf]
    %v457 = vld [vmem:[%s9] sm:$0xf]
    %v458 = vld [vmem:[%s9 + $0x4] sm:$0xf]
    %v459 = vld [vmem:[%s9 + $0x8] sm:$0xf]
    %v460 = vld [vmem:[%s9 + $0xc] sm:$0xf]
    %v465 = vunpack.c.l.b16 %v457
    %v466 = vunpack.c.l.b16 %v458
    %v467 = vunpack.c.l.b16 %v459
    %v468 = vunpack.c.l.b16 %v460
    %v469 = vpack.c.b16 %v466, %v465
    %v470 = vpack.c.b16 %v468, %v467
    %473 = vmatpush.bf16.msra.mxu0 0
    %474 = vmatpush.bf16.msra.mxu0 0
    %475 = vmatpush.bf16.msra.mxu0 0
    %476 = vmatpush.bf16.msra.mxu0 0
    %477 = vmatpush.bf16.msra.mxu0 0
    %478 = vmatpush.bf16.msra.mxu0 0
    %479 = vmatpush.bf16.msra.mxu0 %v470
    %480 = vmatpush.bf16.msra.mxu0 %v469
    %481 = vmatmul.bf16.gmra.mxu0 %v90
    %v482 = vpop.f32.mrf.mxu0
    %v483 = vadd.f32 0.0, %v482
    %v484 = vpop.f32.mrf.mxu0
    %v485 = vadd.f32 0.0, %v484
    %486 = vmatmul.bf16.gmra.mxu0 %v93
    %v487 = vpop.f32.mrf.mxu0
    %v488 = vadd.f32 0.0, %v487
    %v489 = vpop.f32.mrf.mxu0
    %v490 = vadd.f32 0.0, %v489
    %491 = vmatmul.bf16.gmra.mxu0 %v96
    %v492 = vpop.f32.mrf.mxu0
    %v493 = vadd.f32 0.0, %v492
    %v494 = vpop.f32.mrf.mxu0
    %v495 = vadd.f32 0.0, %v494
    %496 = vmatmul.bf16.gmra.mxu0 %v99
    %v497 = vpop.f32.mrf.mxu0
    %v498 = vadd.f32 0.0, %v497
    %v499 = vpop.f32.mrf.mxu0
    %v500 = vadd.f32 0.0, %v499
    %501 = vdwg.mxu0
    %v506 = vunpack.c.l.b16 %v453
    %v507 = vunpack.c.l.b16 %v454
    %v508 = vunpack.c.l.b16 %v455
    %v509 = vunpack.c.l.b16 %v456
    %v510 = vpack.c.b16 %v507, %v506
    %v511 = vpack.c.b16 %v509, %v508
    %v515 = vsel %vm88, %v449, 0
    %v518 = vsel %vm88, %v450, 0
    %v521 = vsel %vm88, %v451, 0
    %v524 = vsel %vm88, %v452, 0
    %526 = vmatpush.bf16.msra.mxu0 0
    %527 = vmatpush.bf16.msra.mxu0 0
    %528 = vmatpush.bf16.msra.mxu0 0
    %529 = vmatpush.bf16.msra.mxu0 0
    %530 = vmatpush.bf16.msra.mxu0 0
    %531 = vmatpush.bf16.msra.mxu0 0
    %532 = vmatpush.bf16.msra.mxu0 %v511
    %533 = vmatpush.bf16.msra.mxu0 %v510
    %534 = vmatmul.bf16.gmra.mxu0 %v515
    %v535 = vpop.f32.mrf.mxu0
    %v536 = vadd.f32 %v483, %v535
    %v537 = vpop.f32.mrf.mxu0
    %v538 = vadd.f32 %v485, %v537
    %539 = vmatmul.bf16.gmra.mxu0 %v518
    %v540 = vpop.f32.mrf.mxu0
    %v541 = vadd.f32 %v488, %v540
    %v542 = vpop.f32.mrf.mxu0
    %v543 = vadd.f32 %v490, %v542
    %544 = vmatmul.bf16.gmra.mxu0 %v521
    %v545 = vpop.f32.mrf.mxu0
    %v546 = vadd.f32 %v493, %v545
    %v547 = vpop.f32.mrf.mxu0
    %v548 = vadd.f32 %v495, %v547
    %549 = vmatmul.bf16.gmra.mxu0 %v524
    %v550 = vpop.f32.mrf.mxu0
    %v551 = vadd.f32 %v498, %v550
    %v552 = vpop.f32.mrf.mxu0
    %v553 = vadd.f32 %v500, %v552
    %554 = vdwg.mxu0
    %v555 = vld [vmem:[%s10] sm:$0x1]
    %v557 = vperm.slane %v555, 0
    %v559 = vadd.f32 %v536, %v557
    %v560 = vadd.f32 %v538, %v557
    %v561 = vadd.f32 %v541, %v557
    %v562 = vadd.f32 %v543, %v557
    %v563 = vadd.f32 %v546, %v557
    %v564 = vadd.f32 %v548, %v557
    %v565 = vadd.f32 %v551, %v557
    %v566 = vadd.f32 %v553, %v557
    %567 = vst.msk [vmem:[#allocation2] sm:$0xff] %vm310, %v559
    %568 = vst.msk [vmem:[#allocation2 + $0x8] sm:$0xff] %vm310, %v560
    %569 = vst.msk [vmem:[#allocation2 + $0x10] sm:$0xff] %vm310, %v561
    %570 = vst.msk [vmem:[#allocation2 + $0x18] sm:$0xff] %vm310, %v562
    %571 = vst.msk [vmem:[#allocation2 + $0x20] sm:$0xff] %vm310, %v563
    %572 = vst.msk [vmem:[#allocation2 + $0x28] sm:$0xff] %vm310, %v564
    %573 = vst.msk [vmem:[#allocation2 + $0x30] sm:$0xff] %vm310, %v565
    %574 = vst.msk [vmem:[#allocation2 + $0x38] sm:$0xff] %vm310, %v566
    // Predicated region
    $region46: #{tpu_custom_call.1} parent=1 // pred_check
      _
    $region47: #{tpu_custom_call.1} parent=1 // pred_check_branch
      %576 = sbr.rel (0) target = $region49
    $region48: #{tpu_custom_call.1} parent=1 // pred_region
      %578 = vsyncadd [#allocation3], 0
      %s579 = sshll.u32 [#allocation2], 4
      %s580 = int_to_ptr.vmem [resolvable:$true] %s579
      %s581 = sshll.u32 %s11, 4
      %s582 = int_to_ptr.hbm [resolvable:$true] %s581
      %587 = dma.vmem_to_hbm [thread:$0]  %s580, 1024, %s582, [#allocation3], 128, 128, 8
    $region49: #{tpu_custom_call.1} parent=1 // pred_fallthru
      _
    // Predicated region
    $region50: #{tpu_custom_call.1} parent=1 // pred_check
      _
    $region51: #{tpu_custom_call.1} parent=1 // pred_check_branch
      %589 = sbr.rel (0) target = $region53
    $region52: #{tpu_custom_call.1} parent=1 // pred_region
      %591 = dma.done [#allocation3], 1024
    $region53: #{tpu_custom_call.1} parent=1 // pred_fallthru
      _
    %592 = vsyncpa [#allocation3], 1

</llo_original>
